<compile_context>
chip_gen: v7x
topology: tpu7x:2x2x1
jax: 0.10.0
libtpu: 0.0.40
codegen_flags: <defaults>
</compile_context>

<pallas_src>
import functools

import jax
import jax.numpy as jnp
from jax.experimental import pallas as pl
from jax.experimental.pallas import tpu as pltpu


def _round_up(x, m):
    return ((x + m - 1) // m) * m


def _bias_offsets(h1, h2, latent):
    """Offsets of (b1, b2, b3) inside the packed [Ntot, 1] bias operand.
    Each segment start is sublane (8) aligned."""
    b1_off = 0
    b2_off = _round_up(h1, 8)
    b3_off = b2_off + _round_up(h2, 8)
    total = b3_off + _round_up(2 * latent, 8)
    return b1_off, b2_off, b3_off, total


def vae_head_kernel(x_ref, eps_ref, w1_ref, w2_ref, w3_ref, b_ref,
                    z_ref, mu_ref, lv_ref, *, h1, h2, latent,
                    b1_off, b2_off, b3_off):
    # Feature-major: x_ref [in, tm] bf16, w*_ref [out, in] bf16 (nn.Linear layout),
    # so each layer is a single MXU matmul with N = tm (lane-dense), f32 accumulate.
    x1 = jnp.dot(w1_ref[...], x_ref[...], preferred_element_type=jnp.float32)
    x1 = jnp.maximum(x1 + b_ref[b1_off:b1_off + h1, :], 0.0)

    x2 = jnp.dot(w2_ref[...], x1.astype(jnp.bfloat16),
                 preferred_element_type=jnp.float32)
    x2 = jnp.maximum(x2 + b_ref[b2_off:b2_off + h2, :], 0.0)

    head = jnp.dot(w3_ref[...], x2.astype(jnp.bfloat16),
                   preferred_element_type=jnp.float32)
    head = head + b_ref[b3_off:b3_off + 2 * latent, :]

    mu = head[:latent, :]                 # static sublane slices (8-aligned)
    logvar = head[latent:2 * latent, :]
    std = jnp.exp(0.5 * logvar)           # f32 EUP path (v5e-safe)
    z = eps_ref[...] * std + mu

    # Full-tile, lane-dense stores (batch on the lane axis).
    z_ref[...] = z
    mu_ref[...] = mu
    lv_ref[...] = logvar


def _default_num_row_blocks():
    """1 grid step on single-TC chips (v5e/v6e); 2 on v7x (2 TCs/chip)."""
    try:
        kind = jax.devices()[0].device_kind.lower()
        if "v7" in kind or "7x" in kind:
            return 2
    except Exception:  # best effort; a single step is always correct
        pass
    return 1


def vae_head_forward(h, action, params, eps, *, num_row_blocks=None):
    """h: [B, latent] f32, action: [B, action] f32 (or None),
    eps: [B, latent] f32 ~ N(0,1) (stands in for torch.randn_like).

    Returns (z, mu, logvar), each [B, latent] f32.
    """
    w1, w2, w3, bias = params            # w*: [out, in] bf16, bias: [Ntot, 1] f32
    B, latent = h.shape
    h1 = w1.shape[0]
    h2 = w2.shape[0]
    assert w3.shape[0] == 2 * latent
    b1_off, b2_off, b3_off, _ = _bias_offsets(h1, h2, latent)

    # relu + concat + transpose + bf16 cast fuse at the XLA boundary into one
    # feature-major [in, B] bf16 operand (halves the x DMA, no in-kernel cast).
    hr = jnp.maximum(h, 0.0)
    x = hr if action is None else jnp.concatenate([hr, action], axis=-1)
    x_t = x.T.astype(jnp.bfloat16)       # [in, B]
    eps_t = eps.T                        # [latent, B] f32
    in_size = x_t.shape[0]

    if num_row_blocks is None:
        num_row_blocks = _default_num_row_blocks()
    num_row_blocks = max(1, min(num_row_blocks, pl.cdiv(B, 128)))

    tm = _round_up(pl.cdiv(B, num_row_blocks), 128)   # lane dim: multiple of 128
    b_pad = tm * num_row_blocks
    if b_pad != B:
        pad = ((0, 0), (0, b_pad - B))
        x_t = jnp.pad(x_t, pad)
        eps_t = jnp.pad(eps_t, pad)

    row = lambda i: (0, i)
    const = lambda i: (0, 0)   # weights / biases: DMA'd once, VMEM-resident

    kernel = functools.partial(
        vae_head_kernel, h1=h1, h2=h2, latent=latent,
        b1_off=b1_off, b2_off=b2_off, b3_off=b3_off)

    out_sds = jax.ShapeDtypeStruct((latent, b_pad), jnp.float32)
    z_t, mu_t, lv_t = pl.pallas_call(
        kernel,
        out_shape=(out_sds, out_sds, out_sds),
        grid=(num_row_blocks,),
        in_specs=[
            pl.BlockSpec((in_size, tm), row),            # x^T   (bf16)
            pl.BlockSpec((latent, tm), row),             # eps^T (f32)
            pl.BlockSpec((h1, in_size), const),          # w1 [out,in] bf16
            pl.BlockSpec((h2, h1), const),               # w2
            pl.BlockSpec((2 * latent, h2), const),       # w3 (mu|logvar fused)
            pl.BlockSpec((bias.shape[0], 1), const),     # packed biases (f32)
        ],
        out_specs=(
            pl.BlockSpec((latent, tm), row),             # z^T
            pl.BlockSpec((latent, tm), row),             # mu^T
            pl.BlockSpec((latent, tm), row),             # logvar^T
        ),
        compiler_params=pltpu.CompilerParams(
            dimension_semantics=("parallel",)),          # batch tiles independent
    )(x_t, eps_t, w1, w2, w3, bias)

    # Layout plumbing back to the module's [B, latent] convention.
    z = z_t[:, :B].T
    mu = mu_t[:, :B].T
    logvar = lv_t[:, :B].T
    return z, mu, logvar


def init_params(key, latent_size, action_size, hidden_sizes):
    """MLP head matching MlpModel(latent+action -> hidden_sizes -> 2*latent).
    Weights are stored in nn.Linear layout [out, in], bf16; the four biases are
    packed (8-aligned segments) into a single [Ntot, 1] f32 operand."""
    assert len(hidden_sizes) == 2, "this synthetic kernel hardcodes 2 hidden layers"
    in_size = latent_size + action_size
    h1, h2 = hidden_sizes
    b1_off, b2_off, b3_off, total = _bias_offsets(h1, h2, latent_size)

    k1, k2, k3, k4 = jax.random.split(key, 4)
    w1 = (jax.random.normal(k1, (h1, in_size), jnp.float32) * 0.05).astype(jnp.bfloat16)
    w2 = (jax.random.normal(k2, (h2, h1), jnp.float32) * 0.05).astype(jnp.bfloat16)
    w3 = (jax.random.normal(k3, (2 * latent_size, h2), jnp.float32) * 0.05).astype(jnp.bfloat16)

    kb1, kb2, kb3 = jax.random.split(k4, 3)
    b1 = jax.random.normal(kb1, (h1,), jnp.float32) * 0.05
    b2 = jax.random.normal(kb2, (h2,), jnp.float32) * 0.05
    b3 = jax.random.normal(kb3, (2 * latent_size,), jnp.float32) * 0.05

    bias = jnp.zeros((total, 1), jnp.float32)
    bias = bias.at[b1_off:b1_off + h1, 0].set(b1)
    bias = bias.at[b2_off:b2_off + h2, 0].set(b2)
    bias = bias.at[b3_off:b3_off + 2 * latent_size, 0].set(b3)
    return (w1, w2, w3, bias)


def reference_forward(h, action, params, eps):
    """Pure-JAX reference mirroring the kernel's bf16-weight / f32-accum math,
    in the module's row-major orientation (nn.Linear: y = x @ W^T + b)."""
    w1, w2, w3, bias = params
    latent = h.shape[-1]
    h1 = w1.shape[0]
    h2 = w2.shape[0]
    b1_off, b2_off, b3_off, _ = _bias_offsets(h1, h2, latent)
    b1 = bias[b1_off:b1_off + h1, 0]
    b2 = bias[b2_off:b2_off + h2, 0]
    b3 = bias[b3_off:b3_off + 2 * latent, 0]

    hr = jnp.maximum(h, 0.0)
    x = hr if action is None else jnp.concatenate([hr, action], axis=-1)
    x = x.astype(jnp.bfloat16)
    x1 = jnp.maximum(jnp.dot(x, w1.T, preferred_element_type=jnp.float32) + b1, 0.0)
    x2 = jnp.maximum(jnp.dot(x1.astype(jnp.bfloat16), w2.T,
                             preferred_element_type=jnp.float32) + b2, 0.0)
    head = jnp.dot(x2.astype(jnp.bfloat16), w3.T,
                   preferred_element_type=jnp.float32) + b3
    mu = head[:, :latent]
    logvar = head[:, latent:]
    std = jnp.exp(0.5 * logvar)
    z = eps * std + mu
    return z, mu, logvar


if __name__ == "__main__":
    # Small but non-trivial: B=200 exercises the padded tail, and both row
    # blocks when running with two grid steps (v7x path).
    B = 200
    latent_size = 32
    action_size = 16
    hidden_sizes = [64, 64]

    key = jax.random.PRNGKey(0)
    kh, ka, keps, kp = jax.random.split(key, 4)

    h = jax.random.normal(kh, (B, latent_size), jnp.float32)
    action = jax.random.normal(ka, (B, action_size), jnp.float32)
    # TODO(synk): torch.randn_like eps is drawn host-side here (deterministic),
    # not bit-compatible with torch's RNG.
    eps = jax.random.normal(keps, (B, latent_size), jnp.float32)

    params = init_params(kp, latent_size, action_size, hidden_sizes)

    fwd = jax.jit(vae_head_forward)
    z, mu, logvar = fwd(h, action, params, eps)
    jax.block_until_ready((z, mu, logvar))

    z_r, mu_r, lv_r = reference_forward(h, action, params, eps)
    assert jnp.allclose(mu, mu_r, atol=2e-3, rtol=2e-3), "mu mismatch"
    assert jnp.allclose(logvar, lv_r, atol=2e-3, rtol=2e-3), "logvar mismatch"
    assert jnp.allclose(z, z_r, atol=2e-3, rtol=2e-3), "z mismatch"

    print("KERNEL_OK")
</pallas_src>

<mosaic_0001>
module attributes {stable_mosaic.version = 11 : i64} {
  func.func @vae_head_kernel(%arg0: i32, %arg1: memref<48x256xbf16, #tpu.memory_space<vmem>>, %arg2: memref<32x256xf32, #tpu.memory_space<vmem>>, %arg3: memref<64x48xbf16, #tpu.memory_space<vmem>>, %arg4: memref<64x64xbf16, #tpu.memory_space<vmem>>, %arg5: memref<64x64xbf16, #tpu.memory_space<vmem>>, %arg6: memref<192x1xf32, #tpu.memory_space<vmem>>, %arg7: memref<32x256xf32, #tpu.memory_space<vmem>>, %arg8: memref<32x256xf32, #tpu.memory_space<vmem>>, %arg9: memref<32x256xf32, #tpu.memory_space<vmem>>) attributes {dimension_semantics = [#tpu.dimension_semantics<parallel>], iteration_bounds = array<i64: 1>, scalar_prefetch = 0 : i64, scratch_operands = 0 : i64, tpu.core_type = #tpu.core_type<tc>, window_params = [{transform_indices = @transform_0, window_bounds = array<i64: 48, 256>}, {transform_indices = @transform_1, window_bounds = array<i64: 32, 256>}, {pipeline_mode = #tpu.pipeline_mode<synchronous>, transform_indices = @transform_2, window_bounds = array<i64: 64, 48>}, {pipeline_mode = #tpu.pipeline_mode<synchronous>, transform_indices = @transform_3, window_bounds = array<i64: 64, 64>}, {pipeline_mode = #tpu.pipeline_mode<synchronous>, transform_indices = @transform_4, window_bounds = array<i64: 64, 64>}, {pipeline_mode = #tpu.pipeline_mode<synchronous>, transform_indices = @transform_5, window_bounds = array<i64: 192, 1>}, {transform_indices = @transform_6, window_bounds = array<i64: 32, 256>}, {transform_indices = @transform_7, window_bounds = array<i64: 32, 256>}, {transform_indices = @transform_8, window_bounds = array<i64: 32, 256>}]} {
    %c0 = arith.constant 0 : index
    %c0_0 = arith.constant 0 : index
    %0 = vector.load %arg3[%c0, %c0_0] : memref<64x48xbf16, #tpu.memory_space<vmem>>, vector<64x48xbf16>
    %c0_1 = arith.constant 0 : index
    %c0_2 = arith.constant 0 : index
    %1 = vector.load %arg1[%c0_1, %c0_2] : memref<48x256xbf16, #tpu.memory_space<vmem>>, vector<48x256xbf16>
    %cst = arith.constant dense<0.000000e+00> : vector<64x256xf32>
    %2 = tpu.matmul %0, %1, %cst {dimension_numbers = #tpu.dot_dimension_numbers<[1], [0], [0], [1], [0, 0, 1, 1], [], []>} : vector<64x48xbf16>, vector<48x256xbf16>, vector<64x256xf32> -> vector<64x256xf32>
    %c0_3 = arith.constant 0 : index
    %c0_4 = arith.constant 0 : index
    %3 = vector.load %arg6[%c0_3, %c0_4] : memref<192x1xf32, #tpu.memory_space<vmem>>, vector<64x1xf32>
    %4 = vector.broadcast %3 : vector<64x1xf32> to vector<64x256xf32>
    %5 = arith.addf %2, %4 : vector<64x256xf32>
    %cst_5 = arith.constant 0.000000e+00 : f32
    %6 = vector.broadcast %cst_5 : f32 to vector<64x256xf32>
    %7 = arith.maximumf %5, %6 : vector<64x256xf32>
    %c0_6 = arith.constant 0 : index
    %c0_7 = arith.constant 0 : index
    %8 = vector.load %arg4[%c0_6, %c0_7] : memref<64x64xbf16, #tpu.memory_space<vmem>>, vector<64x64xbf16>
    %9 = arith.truncf %7 : vector<64x256xf32> to vector<64x256xbf16>
    %cst_8 = arith.constant dense<0.000000e+00> : vector<64x256xf32>
    %10 = tpu.matmul %8, %9, %cst_8 {dimension_numbers = #tpu.dot_dimension_numbers<[1], [0], [0], [1], [0, 0, 1, 1], [], []>} : vector<64x64xbf16>, vector<64x256xbf16>, vector<64x256xf32> -> vector<64x256xf32>
    %c64 = arith.constant 64 : index
    %c0_9 = arith.constant 0 : index
    %11 = vector.load %arg6[%c64, %c0_9] : memref<192x1xf32, #tpu.memory_space<vmem>>, vector<64x1xf32>
    %12 = vector.broadcast %11 : vector<64x1xf32> to vector<64x256xf32>
    %13 = arith.addf %10, %12 : vector<64x256xf32>
    %cst_10 = arith.constant 0.000000e+00 : f32
    %14 = vector.broadcast %cst_10 : f32 to vector<64x256xf32>
    %15 = arith.maximumf %13, %14 : vector<64x256xf32>
    %c0_11 = arith.constant 0 : index
    %c0_12 = arith.constant 0 : index
    %16 = vector.load %arg5[%c0_11, %c0_12] : memref<64x64xbf16, #tpu.memory_space<vmem>>, vector<64x64xbf16>
    %17 = arith.truncf %15 : vector<64x256xf32> to vector<64x256xbf16>
    %cst_13 = arith.constant dense<0.000000e+00> : vector<64x256xf32>
    %18 = tpu.matmul %16, %17, %cst_13 {dimension_numbers = #tpu.dot_dimension_numbers<[1], [0], [0], [1], [0, 0, 1, 1], [], []>} : vector<64x64xbf16>, vector<64x256xbf16>, vector<64x256xf32> -> vector<64x256xf32>
    %c128 = arith.constant 128 : index
    %c0_14 = arith.constant 0 : index
    %19 = vector.load %arg6[%c128, %c0_14] : memref<192x1xf32, #tpu.memory_space<vmem>>, vector<64x1xf32>
    %20 = vector.broadcast %19 : vector<64x1xf32> to vector<64x256xf32>
    %21 = arith.addf %18, %20 : vector<64x256xf32>
    %22 = vector.extract_strided_slice %21 {offsets = [0, 0], sizes = [32, 256], strides = [1, 1]} : vector<64x256xf32> to vector<32x256xf32>
    %23 = vector.extract_strided_slice %21 {offsets = [32, 0], sizes = [32, 256], strides = [1, 1]} : vector<64x256xf32> to vector<32x256xf32>
    %cst_15 = arith.constant 5.000000e-01 : f32
    %24 = vector.broadcast %cst_15 : f32 to vector<32x256xf32>
    %25 = arith.mulf %24, %23 : vector<32x256xf32>
    %26 = math.exp %25 : vector<32x256xf32>
    %c0_16 = arith.constant 0 : index
    %c0_17 = arith.constant 0 : index
    %27 = vector.load %arg2[%c0_16, %c0_17] : memref<32x256xf32, #tpu.memory_space<vmem>>, vector<32x256xf32>
    %28 = arith.mulf %27, %26 : vector<32x256xf32>
    %29 = arith.addf %28, %22 : vector<32x256xf32>
    %c0_18 = arith.constant 0 : index
    %c0_19 = arith.constant 0 : index
    %30 = vector.load %arg7[%c0_18, %c0_19] : memref<32x256xf32, #tpu.memory_space<vmem>>, vector<32x256xf32>
    tpu.vector_store %arg7[%c0_18, %c0_19], %29 {strides = array<i32>} : memref<32x256xf32, #tpu.memory_space<vmem>>, vector<32x256xf32>,
    %c0_20 = arith.constant 0 : index
    %c0_21 = arith.constant 0 : index
    %31 = vector.load %arg8[%c0_20, %c0_21] : memref<32x256xf32, #tpu.memory_space<vmem>>, vector<32x256xf32>
    tpu.vector_store %arg8[%c0_20, %c0_21], %22 {strides = array<i32>} : memref<32x256xf32, #tpu.memory_space<vmem>>, vector<32x256xf32>,
    %c0_22 = arith.constant 0 : index
    %c0_23 = arith.constant 0 : index
    %32 = vector.load %arg9[%c0_22, %c0_23] : memref<32x256xf32, #tpu.memory_space<vmem>>, vector<32x256xf32>
    tpu.vector_store %arg9[%c0_22, %c0_23], %23 {strides = array<i32>} : memref<32x256xf32, #tpu.memory_space<vmem>>, vector<32x256xf32>,
    return
  }
  func.func @transform_0(%arg0: i32) -> (i32, i32) {
    %c0_i32 = arith.constant 0 : i32
    %c0_i32_0 = arith.constant 0 : i32
    return %c0_i32, %arg0 : i32, i32
  }
  func.func @transform_1(%arg0: i32) -> (i32, i32) {
    %c0_i32 = arith.constant 0 : i32
    %c0_i32_0 = arith.constant 0 : i32
    return %c0_i32, %arg0 : i32, i32
  }
  func.func @transform_2(%arg0: i32) -> (i32, i32) {
    %c0_i32 = arith.constant 0 : i32
    %c0_i32_0 = arith.constant 0 : i32
    %c0_i32_1 = arith.constant 0 : i32
    return %c0_i32, %c0_i32_0 : i32, i32
  }
  func.func @transform_3(%arg0: i32) -> (i32, i32) {
    %c0_i32 = arith.constant 0 : i32
    %c0_i32_0 = arith.constant 0 : i32
    %c0_i32_1 = arith.constant 0 : i32
    return %c0_i32, %c0_i32_0 : i32, i32
  }
  func.func @transform_4(%arg0: i32) -> (i32, i32) {
    %c0_i32 = arith.constant 0 : i32
    %c0_i32_0 = arith.constant 0 : i32
    %c0_i32_1 = arith.constant 0 : i32
    return %c0_i32, %c0_i32_0 : i32, i32
  }
  func.func @transform_5(%arg0: i32) -> (i32, i32) {
    %c0_i32 = arith.constant 0 : i32
    %c0_i32_0 = arith.constant 0 : i32
    %c0_i32_1 = arith.constant 0 : i32
    return %c0_i32, %c0_i32_0 : i32, i32
  }
  func.func @transform_6(%arg0: i32) -> (i32, i32) {
    %c0_i32 = arith.constant 0 : i32
    %c0_i32_0 = arith.constant 0 : i32
    return %c0_i32, %arg0 : i32, i32
  }
  func.func @transform_7(%arg0: i32) -> (i32, i32) {
    %c0_i32 = arith.constant 0 : i32
    %c0_i32_0 = arith.constant 0 : i32
    return %c0_i32, %arg0 : i32, i32
  }
  func.func @transform_8(%arg0: i32) -> (i32, i32) {
    %c0_i32 = arith.constant 0 : i32
    %c0_i32_0 = arith.constant 0 : i32
    return %c0_i32, %arg0 : i32, i32
  }
}

</mosaic_0001>

<llo_original>
// kernel: vae_head_forward.1
$region0: #{vae_head_forward.1}
  #allocation0 [shape = 'u32[]', space=smem, size = 0x4, offset = 0x4, fixed_abs, tag = 'smem constant byte address 0x4 - core index']
  #allocation1 [shape = 'u32[144,128]{1,0:T(1,128)}', space=vmem, size = 0x12000, scoped, tag = 'internal scratch']
  %s0 = inlined_call_operand.vmem [shape: bf16[48,256], index: 0, kind: input, shape index: {}]
  %s1 = inlined_call_operand.vmem [shape: f32[32,256], index: 1, kind: input, shape index: {}]
  %s2 = inlined_call_operand.vmem [shape: bf16[64,48], index: 2, kind: input, shape index: {}]
  %s3 = inlined_call_operand.vmem [shape: bf16[64,64], index: 3, kind: input, shape index: {}]
  %s4 = inlined_call_operand.vmem [shape: bf16[64,64], index: 4, kind: input, shape index: {}]
  %s5 = inlined_call_operand.vmem [shape: f32[192,1], index: 5, kind: input, shape index: {}]
  %s6 = inlined_call_operand.vmem [shape: f32[32,256], index: 6, kind: output, shape index: {0}]
  %s7 = inlined_call_operand.vmem [shape: f32[32,256], index: 7, kind: output, shape index: {1}]
  %s8 = inlined_call_operand.vmem [shape: f32[32,256], index: 8, kind: output, shape index: {2}]
  %9 = xla_tuple %s6, %s7, %s8
  %s10 = sld [smem:[#allocation0]]
  $region50: #{vae_head_forward.1} parent=0
    _
  %s12 = ssub.s32 1, %s10
  %s13 = scalar_select 0, %s12, %s10
  // Predicated region
  $region2: #{vae_head_forward.1} parent=0 // pred_check
    _
  $region3: #{vae_head_forward.1} parent=0 // pred_check_branch
    %15 = sbr.rel (0) target = $region5
  $region4: #{vae_head_forward.1} parent=0 // pred_region
    _
  $region5: #{vae_head_forward.1} parent=0 // pred_fallthru
    _
  // Predicated region
  $region6: #{vae_head_forward.1} parent=0 // pred_check
    _
  $region7: #{vae_head_forward.1} parent=0 // pred_check_branch
    %17 = sbr.rel (0) target = $region9
  $region8: #{vae_head_forward.1} parent=0 // pred_region
    _
  $region9: #{vae_head_forward.1} parent=0 // pred_fallthru
    _
  // Predicated region
  $region10: #{vae_head_forward.1} parent=0 // pred_check
    _
  $region11: #{vae_head_forward.1} parent=0 // pred_check_branch
    %19 = sbr.rel (0) target = $region13
  $region12: #{vae_head_forward.1} parent=0 // pred_region
    _
  $region13: #{vae_head_forward.1} parent=0 // pred_fallthru
    _
  // Predicated region
  $region14: #{vae_head_forward.1} parent=0 // pred_check
    _
  $region15: #{vae_head_forward.1} parent=0 // pred_check_branch
    %21 = sbr.rel (0) target = $region17
  $region16: #{vae_head_forward.1} parent=0 // pred_region
    _
  $region17: #{vae_head_forward.1} parent=0 // pred_fallthru
    _
  // Predicated region
  $region18: #{vae_head_forward.1} parent=0 // pred_check
    _
  $region19: #{vae_head_forward.1} parent=0 // pred_check_branch
    %23 = sbr.rel (0) target = $region21
  $region20: #{vae_head_forward.1} parent=0 // pred_region
    _
  $region21: #{vae_head_forward.1} parent=0 // pred_fallthru
    _
  // Predicated region
  $region22: #{vae_head_forward.1} parent=0 // pred_check
    _
  $region23: #{vae_head_forward.1} parent=0 // pred_check_branch
    %25 = sbr.rel (0) target = $region25
  $region24: #{vae_head_forward.1} parent=0 // pred_region
    _
  $region25: #{vae_head_forward.1} parent=0 // pred_fallthru
    _
  %v27 = vld [vmem:[%s2] sm:$0xf]
  %v28 = vld [vmem:[%s2 + $0x4] sm:$0xf]
  %v29 = vld [vmem:[%s2 + $0x8] sm:$0xf]
  %v30 = vld [vmem:[%s2 + $0xc] sm:$0xf]
  %v31 = vld [vmem:[%s2 + $0x10] sm:$0xf]
  %v32 = vld [vmem:[%s2 + $0x14] sm:$0xf]
  %v33 = vld [vmem:[%s2 + $0x18] sm:$0xf]
  %v34 = vld [vmem:[%s2 + $0x1c] sm:$0xf]
  %v35 = vld [vmem:[%s0] sm:$0xff]
  %v36 = vld [vmem:[%s0 + $0x8] sm:$0xff]
  %v37 = vld [vmem:[%s0 + $0x10] sm:$0xff]
  %v38 = vld [vmem:[%s0 + $0x18] sm:$0xff]
  %v39 = vld [vmem:[%s0 + $0x20] sm:$0xff]
  %v40 = vld [vmem:[%s0 + $0x28] sm:$0xff]
  %v41 = vld [vmem:[%s5] sm:$0xff]
  %v42 = vld [vmem:[%s5 + $0x8] sm:$0xff]
  %v43 = vld [vmem:[%s5 + $0x10] sm:$0xff]
  %v44 = vld [vmem:[%s5 + $0x18] sm:$0xff]
  %v45 = vld [vmem:[%s5 + $0x20] sm:$0xff]
  %v46 = vld [vmem:[%s5 + $0x28] sm:$0xff]
  %v47 = vld [vmem:[%s5 + $0x30] sm:$0xff]
  %v48 = vld [vmem:[%s5 + $0x38] sm:$0xff]
  %50 = vset.pattern.permute.xlu0 0
  %51 = vperm.xlu0 %50, %v41
  %v52 = vpop.permute.xlu0 %51
  %55 = vset.pattern.permute.xlu0 0
  %56 = vperm.xlu0 %55, %v42
  %v57 = vpop.permute.xlu0 %56
  %60 = vset.pattern.permute.xlu0 0
  %61 = vperm.xlu0 %60, %v43
  %v62 = vpop.permute.xlu0 %61
  %65 = vset.pattern.permute.xlu0 0
  %66 = vperm.xlu0 %65, %v44
  %v67 = vpop.permute.xlu0 %66
  %70 = vset.pattern.permute.xlu0 0
  %71 = vperm.xlu0 %70, %v45
  %v72 = vpop.permute.xlu0 %71
  %75 = vset.pattern.permute.xlu0 0
  %76 = vperm.xlu0 %75, %v46
  %v77 = vpop.permute.xlu0 %76
  %80 = vset.pattern.permute.xlu0 0
  %81 = vperm.xlu0 %80, %v47
  %v82 = vpop.permute.xlu0 %81
  %85 = vset.pattern.permute.xlu0 0
  %86 = vperm.xlu0 %85, %v48
  %v87 = vpop.permute.xlu0 %86
  %v97 = vunpack.c.l.b16 %v27
  %v98 = vunpack.c.l.b16 %v28
  %v99 = vunpack.c.l.b16 %v29
  %v100 = vunpack.c.l.b16 %v30
  %v101 = vunpack.c.l.b16 %v31
  %v102 = vunpack.c.l.b16 %v32
  %v103 = vunpack.c.l.b16 %v33
  %v104 = vunpack.c.l.b16 %v34
  %v105 = vpack.c.b16 %v98, %v97
  %v106 = vpack.c.b16 %v100, %v99
  %v107 = vpack.c.b16 %v102, %v101
  %v108 = vpack.c.b16 %v104, %v103
  %v115 = vunpack.c.l.b16 %v35
  %v116 = vunpack.c.h.b16 %v35
  %v117 = vunpack.c.l.b16 %v36
  %v118 = vunpack.c.h.b16 %v36
  %v119 = vunpack.c.l.b16 %v37
  %v120 = vunpack.c.h.b16 %v37
  %v121 = vunpack.c.l.b16 %v38
  %v122 = vunpack.c.h.b16 %v38
  %v123 = vunpack.c.l.b16 %v39
  %v124 = vunpack.c.h.b16 %v39
  %v125 = vunpack.c.l.b16 %v40
  %v126 = vunpack.c.h.b16 %v40
  %v127 = vpack.c.b16 %v117, %v115
  %v128 = vpack.c.b16 %v118, %v116
  %v129 = vpack.c.b16 %v121, %v119
  %v130 = vpack.c.b16 %v122, %v120
  %v131 = vpack.c.b16 %v125, %v123
  %v132 = vpack.c.b16 %v126, %v124
  %vm139 = vcmask 392192
  %v141 = vsel %vm139, %v105, 0
  %v144 = vsel %vm139, %v106, 0
  %v147 = vsel %vm139, %v107, 0
  %v150 = vsel %vm139, %v108, 0
  %152 = vmatprep.subr.bf16.mxu0 %v128
  %153 = vmatpush1.bf16.msra.mxu0 %v127
  %154 = vmatprep.subr.bf16.mxu0 %v130
  %155 = vmatpush1.bf16.msra.mxu0 %v129
  %156 = vmatprep.subr.bf16.mxu0 %v132
  %157 = vmatpush1.bf16.msra.mxu0 %v131
  %158 = vmatprep.subr.bf16.mxu0 0
  %159 = vmatpush1.bf16.msra.mxu0 0
  %160 = vmatprep.subr.bf16.mxu0 0
  %161 = vmatpush1.bf16.msra.mxu0 0
  %162 = vmatprep.subr.bf16.mxu0 0
  %163 = vmatpush1.bf16.msra.mxu0 0
  %164 = vmatprep.subr.bf16.mxu0 0
  %165 = vmatpush1.bf16.msra.mxu0 0
  %166 = vmatprep.subr.bf16.mxu0 0
  %167 = vmatpush1.bf16.msra.mxu0 0
  %168 = vmatprep.subr.bf16.mxu0 0
  %169 = vmatpush1.bf16.msra.mxu0 0
  %170 = vmatprep.subr.bf16.mxu0 0
  %171 = vmatpush1.bf16.msra.mxu0 0
  %172 = vmatprep.subr.bf16.mxu0 0
  %173 = vmatpush1.bf16.msra.mxu0 0
  %174 = vmatprep.subr.bf16.mxu0 0
  %175 = vmatpush1.bf16.msra.mxu0 0
  %176 = vmatprep.subr.bf16.mxu0 0
  %177 = vmatpush1.bf16.msra.mxu0 0
  %178 = vmatprep.subr.bf16.mxu0 0
  %179 = vmatpush1.bf16.msra.mxu0 0
  %180 = vmatprep.subr.bf16.mxu0 0
  %181 = vmatpush1.bf16.msra.mxu0 0
  %182 = vmatprep.subr.bf16.mxu0 0
  %183 = vmatpush1.bf16.msra.mxu0 0
  %184 = vmatprep.mubr.bf16.mxu0 0
  %185 = vmatmul.mubr.bf16.gmra.mrb[0].mxu0 %v141
  %v186 = vpop.f32.mrb[0].mxu0
  %v187 = vadd.f32 %v52, %v186
  %v188 = vpop.f32.mrb[0].mxu0
  %v189 = vadd.f32 %v52, %v188
  %v190 = vpop.f32.mrb[0].mxu0
  %v191 = vadd.f32 %v57, %v190
  %v192 = vpop.f32.mrb[0].mxu0
  %v193 = vadd.f32 %v57, %v192
  %194 = vmatprep.mubr.bf16.mxu0 0
  %195 = vmatmul.mubr.bf16.gmra.mrb[0].mxu0 %v144
  %v196 = vpop.f32.mrb[0].mxu0
  %v197 = vadd.f32 %v62, %v196
  %v198 = vpop.f32.mrb[0].mxu0
  %v199 = vadd.f32 %v62, %v198
  %v200 = vpop.f32.mrb[0].mxu0
  %v201 = vadd.f32 %v67, %v200
  %v202 = vpop.f32.mrb[0].mxu0
  %v203 = vadd.f32 %v67, %v202
  %204 = vmatprep.mubr.bf16.mxu0 0
  %205 = vmatmul.mubr.bf16.gmra.mrb[0].mxu0 %v147
  %v206 = vpop.f32.mrb[0].mxu0
  %v207 = vadd.f32 %v72, %v206
  %v208 = vpop.f32.mrb[0].mxu0
  %v209 = vadd.f32 %v72, %v208
  %v210 = vpop.f32.mrb[0].mxu0
  %v211 = vadd.f32 %v77, %v210
  %v212 = vpop.f32.mrb[0].mxu0
  %v213 = vadd.f32 %v77, %v212
  %214 = vmatprep.mubr.bf16.mxu0 0
  %215 = vmatmul.mubr.bf16.gmra.mrb[0].mxu0 %v150
  %v216 = vpop.f32.mrb[0].mxu0
  %v217 = vadd.f32 %v82, %v216
  %v218 = vpop.f32.mrb[0].mxu0
  %v219 = vadd.f32 %v82, %v218
  %v220 = vpop.f32.mrb[0].mxu0
  %v221 = vadd.f32 %v87, %v220
  %v222 = vpop.f32.mrb[0].mxu0
  %v223 = vadd.f32 %v87, %v222
  %224 = vdwg.mxu0
  %v225 = vmax.f32 %v187, 0.0
  %v226 = vmax.f32 %v189, 0.0
  %v227 = vmax.f32 %v191, 0.0
  %v228 = vmax.f32 %v193, 0.0
  %v229 = vmax.f32 %v197, 0.0
  %v230 = vmax.f32 %v199, 0.0
  %v231 = vmax.f32 %v201, 0.0
  %v232 = vmax.f32 %v203, 0.0
  %v233 = vmax.f32 %v207, 0.0
  %v234 = vmax.f32 %v209, 0.0
  %v235 = vmax.f32 %v211, 0.0
  %v236 = vmax.f32 %v213, 0.0
  %v237 = vmax.f32 %v217, 0.0
  %v238 = vmax.f32 %v219, 0.0
  %v239 = vmax.f32 %v221, 0.0
  %v240 = vmax.f32 %v223, 0.0
  %v241 = vld [vmem:[%s3] sm:$0xf]
  %v242 = vld [vmem:[%s3 + $0x4] sm:$0xf]
  %v243 = vld [vmem:[%s3 + $0x8] sm:$0xf]
  %v244 = vld [vmem:[%s3 + $0xc] sm:$0xf]
  %v245 = vld [vmem:[%s3 + $0x10] sm:$0xf]
  %v246 = vld [vmem:[%s3 + $0x14] sm:$0xf]
  %v247 = vld [vmem:[%s3 + $0x18] sm:$0xf]
  %v248 = vld [vmem:[%s3 + $0x1c] sm:$0xf]
  %v249 = vpack.c.bf16 %v227, %v225
  %v250 = vpack.c.bf16 %v228, %v226
  %v251 = vpack.c.bf16 %v231, %v229
  %v252 = vpack.c.bf16 %v232, %v230
  %v253 = vpack.c.bf16 %v235, %v233
  %v254 = vpack.c.bf16 %v236, %v234
  %v255 = vpack.c.bf16 %v239, %v237
  %v256 = vpack.c.bf16 %v240, %v238
  %v257 = vld [vmem:[%s5 + $0x40] sm:$0xff]
  %v258 = vld [vmem:[%s5 + $0x48] sm:$0xff]
  %v259 = vld [vmem:[%s5 + $0x50] sm:$0xff]
  %v260 = vld [vmem:[%s5 + $0x58] sm:$0xff]
  %v261 = vld [vmem:[%s5 + $0x60] sm:$0xff]
  %v262 = vld [vmem:[%s5 + $0x68] sm:$0xff]
  %v263 = vld [vmem:[%s5 + $0x70] sm:$0xff]
  %v264 = vld [vmem:[%s5 + $0x78] sm:$0xff]
  %266 = vset.pattern.permute.xlu0 0
  %267 = vperm.xlu0 %266, %v257
  %v268 = vpop.permute.xlu0 %267
  %271 = vset.pattern.permute.xlu0 0
  %272 = vperm.xlu0 %271, %v258
  %v273 = vpop.permute.xlu0 %272
  %276 = vset.pattern.permute.xlu0 0
  %277 = vperm.xlu0 %276, %v259
  %v278 = vpop.permute.xlu0 %277
  %281 = vset.pattern.permute.xlu0 0
  %282 = vperm.xlu0 %281, %v260
  %v283 = vpop.permute.xlu0 %282
  %286 = vset.pattern.permute.xlu0 0
  %287 = vperm.xlu0 %286, %v261
  %v288 = vpop.permute.xlu0 %287
  %291 = vset.pattern.permute.xlu0 0
  %292 = vperm.xlu0 %291, %v262
  %v293 = vpop.permute.xlu0 %292
  %296 = vset.pattern.permute.xlu0 0
  %297 = vperm.xlu0 %296, %v263
  %v298 = vpop.permute.xlu0 %297
  %301 = vset.pattern.permute.xlu0 0
  %302 = vperm.xlu0 %301, %v264
  %v303 = vpop.permute.xlu0 %302
  %v313 = vunpack.c.l.b16 %v241
  %v314 = vunpack.c.l.b16 %v242
  %v315 = vunpack.c.l.b16 %v243
  %v316 = vunpack.c.l.b16 %v244
  %v317 = vunpack.c.l.b16 %v245
  %v318 = vunpack.c.l.b16 %v246
  %v319 = vunpack.c.l.b16 %v247
  %v320 = vunpack.c.l.b16 %v248
  %v321 = vpack.c.b16 %v314, %v313
  %v322 = vpack.c.b16 %v316, %v315
  %v323 = vpack.c.b16 %v318, %v317
  %v324 = vpack.c.b16 %v320, %v319
  %vm325 = vcmask 523264
  %v327 = vsel %vm325, %v321, 0
  %v330 = vsel %vm325, %v322, 0
  %v333 = vsel %vm325, %v323, 0
  %v336 = vsel %vm325, %v324, 0
  %338 = vmatprep.subr.bf16.mxu0 %v250
  %339 = vmatpush1.bf16.msra.mxu0 %v249
  %340 = vmatprep.subr.bf16.mxu0 %v252
  %341 = vmatpush1.bf16.msra.mxu0 %v251
  %342 = vmatprep.subr.bf16.mxu0 %v254
  %343 = vmatpush1.bf16.msra.mxu0 %v253
  %344 = vmatprep.subr.bf16.mxu0 %v256
  %345 = vmatpush1.bf16.msra.mxu0 %v255
  %346 = vmatprep.subr.bf16.mxu0 0
  %347 = vmatpush1.bf16.msra.mxu0 0
  %348 = vmatprep.subr.bf16.mxu0 0
  %349 = vmatpush1.bf16.msra.mxu0 0
  %350 = vmatprep.subr.bf16.mxu0 0
  %351 = vmatpush1.bf16.msra.mxu0 0
  %352 = vmatprep.subr.bf16.mxu0 0
  %353 = vmatpush1.bf16.msra.mxu0 0
  %354 = vmatprep.subr.bf16.mxu0 0
  %355 = vmatpush1.bf16.msra.mxu0 0
  %356 = vmatprep.subr.bf16.mxu0 0
  %357 = vmatpush1.bf16.msra.mxu0 0
  %358 = vmatprep.subr.bf16.mxu0 0
  %359 = vmatpush1.bf16.msra.mxu0 0
  %360 = vmatprep.subr.bf16.mxu0 0
  %361 = vmatpush1.bf16.msra.mxu0 0
  %362 = vmatprep.subr.bf16.mxu0 0
  %363 = vmatpush1.bf16.msra.mxu0 0
  %364 = vmatprep.subr.bf16.mxu0 0
  %365 = vmatpush1.bf16.msra.mxu0 0
  %366 = vmatprep.subr.bf16.mxu0 0
  %367 = vmatpush1.bf16.msra.mxu0 0
  %368 = vmatprep.subr.bf16.mxu0 0
  %369 = vmatpush1.bf16.msra.mxu0 0
  %370 = vmatprep.mubr.bf16.mxu0 0
  %371 = vmatmul.mubr.bf16.gmra.mrb[0].mxu0 %v327
  %v372 = vpop.f32.mrb[0].mxu0
  %v373 = vadd.f32 %v268, %v372
  %v374 = vpop.f32.mrb[0].mxu0
  %v375 = vadd.f32 %v268, %v374
  %v376 = vpop.f32.mrb[0].mxu0
  %v377 = vadd.f32 %v273, %v376
  %v378 = vpop.f32.mrb[0].mxu0
  %v379 = vadd.f32 %v273, %v378
  %380 = vmatprep.mubr.bf16.mxu0 0
  %381 = vmatmul.mubr.bf16.gmra.mrb[0].mxu0 %v330
  %v382 = vpop.f32.mrb[0].mxu0
  %v383 = vadd.f32 %v278, %v382
  %v384 = vpop.f32.mrb[0].mxu0
  %v385 = vadd.f32 %v278, %v384
  %v386 = vpop.f32.mrb[0].mxu0
  %v387 = vadd.f32 %v283, %v386
  %v388 = vpop.f32.mrb[0].mxu0
  %v389 = vadd.f32 %v283, %v388
  %390 = vmatprep.mubr.bf16.mxu0 0
  %391 = vmatmul.mubr.bf16.gmra.mrb[0].mxu0 %v333
  %v392 = vpop.f32.mrb[0].mxu0
  %v393 = vadd.f32 %v288, %v392
  %v394 = vpop.f32.mrb[0].mxu0
  %v395 = vadd.f32 %v288, %v394
  %v396 = vpop.f32.mrb[0].mxu0
  %v397 = vadd.f32 %v293, %v396
  %v398 = vpop.f32.mrb[0].mxu0
  %v399 = vadd.f32 %v293, %v398
  %400 = vmatprep.mubr.bf16.mxu0 0
  %401 = vmatmul.mubr.bf16.gmra.mrb[0].mxu0 %v336
  %v402 = vpop.f32.mrb[0].mxu0
  %v403 = vadd.f32 %v298, %v402
  %v404 = vpop.f32.mrb[0].mxu0
  %v405 = vadd.f32 %v298, %v404
  %v406 = vpop.f32.mrb[0].mxu0
  %v407 = vadd.f32 %v303, %v406
  %v408 = vpop.f32.mrb[0].mxu0
  %v409 = vadd.f32 %v303, %v408
  %410 = vdwg.mxu0
  %v411 = vmax.f32 %v373, 0.0
  %v412 = vmax.f32 %v375, 0.0
  %v413 = vmax.f32 %v377, 0.0
  %v414 = vmax.f32 %v379, 0.0
  %v415 = vmax.f32 %v383, 0.0
  %v416 = vmax.f32 %v385, 0.0
  %v417 = vmax.f32 %v387, 0.0
  %v418 = vmax.f32 %v389, 0.0
  %v419 = vmax.f32 %v393, 0.0
  %v420 = vmax.f32 %v395, 0.0
  %v421 = vmax.f32 %v397, 0.0
  %v422 = vmax.f32 %v399, 0.0
  %v423 = vmax.f32 %v403, 0.0
  %v424 = vmax.f32 %v405, 0.0
  %v425 = vmax.f32 %v407, 0.0
  %v426 = vmax.f32 %v409, 0.0
  %v427 = vld [vmem:[%s4] sm:$0xf]
  %v428 = vld [vmem:[%s4 + $0x4] sm:$0xf]
  %v429 = vld [vmem:[%s4 + $0x8] sm:$0xf]
  %v430 = vld [vmem:[%s4 + $0xc] sm:$0xf]
  %v431 = vld [vmem:[%s4 + $0x10] sm:$0xf]
  %v432 = vld [vmem:[%s4 + $0x14] sm:$0xf]
  %v433 = vld [vmem:[%s4 + $0x18] sm:$0xf]
  %v434 = vld [vmem:[%s4 + $0x1c] sm:$0xf]
  %v435 = vpack.c.bf16 %v413, %v411
  %v436 = vpack.c.bf16 %v414, %v412
  %v437 = vpack.c.bf16 %v417, %v415
  %v438 = vpack.c.bf16 %v418, %v416
  %v439 = vpack.c.bf16 %v421, %v419
  %v440 = vpack.c.bf16 %v422, %v420
  %v441 = vpack.c.bf16 %v425, %v423
  %v442 = vpack.c.bf16 %v426, %v424
  %v443 = vld [vmem:[%s5 + $0x80] sm:$0xff]
  %v444 = vld [vmem:[%s5 + $0x88] sm:$0xff]
  %v445 = vld [vmem:[%s5 + $0x90] sm:$0xff]
  %v446 = vld [vmem:[%s5 + $0x98] sm:$0xff]
  %v447 = vld [vmem:[%s5 + $0xa0] sm:$0xff]
  %v448 = vld [vmem:[%s5 + $0xa8] sm:$0xff]
  %v449 = vld [vmem:[%s5 + $0xb0] sm:$0xff]
  %v450 = vld [vmem:[%s5 + $0xb8] sm:$0xff]
  %452 = vset.pattern.permute.xlu0 0
  %453 = vperm.xlu0 %452, %v443
  %v454 = vpop.permute.xlu0 %453
  %457 = vset.pattern.permute.xlu0 0
  %458 = vperm.xlu0 %457, %v444
  %v459 = vpop.permute.xlu0 %458
  %462 = vset.pattern.permute.xlu0 0
  %463 = vperm.xlu0 %462, %v445
  %v464 = vpop.permute.xlu0 %463
  %467 = vset.pattern.permute.xlu0 0
  %468 = vperm.xlu0 %467, %v446
  %v469 = vpop.permute.xlu0 %468
  %472 = vset.pattern.permute.xlu0 0
  %473 = vperm.xlu0 %472, %v447
  %v474 = vpop.permute.xlu0 %473
  %477 = vset.pattern.permute.xlu0 0
  %478 = vperm.xlu0 %477, %v448
  %v479 = vpop.permute.xlu0 %478
  %482 = vset.pattern.permute.xlu0 0
  %483 = vperm.xlu0 %482, %v449
  %v484 = vpop.permute.xlu0 %483
  %487 = vset.pattern.permute.xlu0 0
  %488 = vperm.xlu0 %487, %v450
  %v489 = vpop.permute.xlu0 %488
  %v499 = vunpack.c.l.b16 %v427
  %v500 = vunpack.c.l.b16 %v428
  %v501 = vunpack.c.l.b16 %v429
  %v502 = vunpack.c.l.b16 %v430
  %v503 = vunpack.c.l.b16 %v431
  %v504 = vunpack.c.l.b16 %v432
  %v505 = vunpack.c.l.b16 %v433
  %v506 = vunpack.c.l.b16 %v434
  %v507 = vpack.c.b16 %v500, %v499
  %v508 = vpack.c.b16 %v502, %v501
  %v509 = vpack.c.b16 %v504, %v503
  %v510 = vpack.c.b16 %v506, %v505
  %v512 = vsel %vm325, %v507, 0
  %v515 = vsel %vm325, %v508, 0
  %v518 = vsel %vm325, %v509, 0
  %v521 = vsel %vm325, %v510, 0
  %523 = vmatprep.subr.bf16.mxu0 %v436
  %524 = vmatpush1.bf16.msra.mxu0 %v435
  %525 = vmatprep.subr.bf16.mxu0 %v438
  %526 = vmatpush1.bf16.msra.mxu0 %v437
  %527 = vmatprep.subr.bf16.mxu0 %v440
  %528 = vmatpush1.bf16.msra.mxu0 %v439
  %529 = vmatprep.subr.bf16.mxu0 %v442
  %530 = vmatpush1.bf16.msra.mxu0 %v441
  %531 = vmatprep.subr.bf16.mxu0 0
  %532 = vmatpush1.bf16.msra.mxu0 0
  %533 = vmatprep.subr.bf16.mxu0 0
  %534 = vmatpush1.bf16.msra.mxu0 0
  %535 = vmatprep.subr.bf16.mxu0 0
  %536 = vmatpush1.bf16.msra.mxu0 0
  %537 = vmatprep.subr.bf16.mxu0 0
  %538 = vmatpush1.bf16.msra.mxu0 0
  %539 = vmatprep.subr.bf16.mxu0 0
  %540 = vmatpush1.bf16.msra.mxu0 0
  %541 = vmatprep.subr.bf16.mxu0 0
  %542 = vmatpush1.bf16.msra.mxu0 0
  %543 = vmatprep.subr.bf16.mxu0 0
  %544 = vmatpush1.bf16.msra.mxu0 0
  %545 = vmatprep.subr.bf16.mxu0 0
  %546 = vmatpush1.bf16.msra.mxu0 0
  %547 = vmatprep.subr.bf16.mxu0 0
  %548 = vmatpush1.bf16.msra.mxu0 0
  %549 = vmatprep.subr.bf16.mxu0 0
  %550 = vmatpush1.bf16.msra.mxu0 0
  %551 = vmatprep.subr.bf16.mxu0 0
  %552 = vmatpush1.bf16.msra.mxu0 0
  %553 = vmatprep.subr.bf16.mxu0 0
  %554 = vmatpush1.bf16.msra.mxu0 0
  %555 = vmatprep.mubr.bf16.mxu0 0
  %556 = vmatmul.mubr.bf16.gmra.mrb[0].mxu0 %v512
  %v557 = vpop.f32.mrb[0].mxu0
  %v558 = vadd.f32 %v454, %v557
  %v559 = vpop.f32.mrb[0].mxu0
  %v560 = vadd.f32 %v454, %v559
  %v561 = vpop.f32.mrb[0].mxu0
  %v562 = vadd.f32 %v459, %v561
  %v563 = vpop.f32.mrb[0].mxu0
  %v564 = vadd.f32 %v459, %v563
  %565 = vmatprep.mubr.bf16.mxu0 0
  %566 = vmatmul.mubr.bf16.gmra.mrb[0].mxu0 %v515
  %v567 = vpop.f32.mrb[0].mxu0
  %v568 = vadd.f32 %v464, %v567
  %v569 = vpop.f32.mrb[0].mxu0
  %v570 = vadd.f32 %v464, %v569
  %v571 = vpop.f32.mrb[0].mxu0
  %v572 = vadd.f32 %v469, %v571
  %v573 = vpop.f32.mrb[0].mxu0
  %v574 = vadd.f32 %v469, %v573
  %575 = vmatprep.mubr.bf16.mxu0 0
  %576 = vmatmul.mubr.bf16.gmra.mrb[0].mxu0 %v518
  %v577 = vpop.f32.mrb[0].mxu0
  %v578 = vadd.f32 %v474, %v577
  %v579 = vpop.f32.mrb[0].mxu0
  %v580 = vadd.f32 %v474, %v579
  %v581 = vpop.f32.mrb[0].mxu0
  %v582 = vadd.f32 %v479, %v581
  %v583 = vpop.f32.mrb[0].mxu0
  %v584 = vadd.f32 %v479, %v583
  %585 = vmatprep.mubr.bf16.mxu0 0
  %586 = vmatmul.mubr.bf16.gmra.mrb[0].mxu0 %v521
  %v587 = vpop.f32.mrb[0].mxu0
  %v588 = vadd.f32 %v484, %v587
  %v589 = vpop.f32.mrb[0].mxu0
  %v590 = vadd.f32 %v484, %v589
  %v591 = vpop.f32.mrb[0].mxu0
  %v592 = vadd.f32 %v489, %v591
  %v593 = vpop.f32.mrb[0].mxu0
  %v594 = vadd.f32 %v489, %v593
  %595 = vdwg.mxu0
  %v596 = vmul.f32 %v578, 0.5
  %v597 = vmul.f32 %v580, 0.5
  %v598 = vmul.f32 %v582, 0.5
  %v599 = vmul.f32 %v584, 0.5
  %v600 = vmul.f32 %v588, 0.5
  %v601 = vmul.f32 %v590, 0.5
  %v602 = vmul.f32 %v592, 0.5
  %v603 = vmul.f32 %v594, 0.5
  %v604 = vmul.f32 %v596, 1.442695
  %v605 = vpow.pop %v604
  %v606 = vmul.f32 %v597, 1.442695
  %v607 = vpow.pop %v606
  %v608 = vmul.f32 %v598, 1.442695
  %v609 = vpow.pop %v608
  %v610 = vmul.f32 %v599, 1.442695
  %v611 = vpow.pop %v610
  %v612 = vmul.f32 %v600, 1.442695
  %v613 = vpow.pop %v612
  %v614 = vmul.f32 %v601, 1.442695
  %v615 = vpow.pop %v614
  %v616 = vmul.f32 %v602, 1.442695
  %v617 = vpow.pop %v616
  %v618 = vmul.f32 %v603, 1.442695
  %v619 = vpow.pop %v618
  %v620 = vld [vmem:[%s1] sm:$0xff]
  %v621 = vld [vmem:[%s1 + $0x8] sm:$0xff]
  %v622 = vld [vmem:[%s1 + $0x10] sm:$0xff]
  %v623 = vld [vmem:[%s1 + $0x18] sm:$0xff]
  %v624 = vld [vmem:[%s1 + $0x20] sm:$0xff]
  %v625 = vld [vmem:[%s1 + $0x28] sm:$0xff]
  %v626 = vld [vmem:[%s1 + $0x30] sm:$0xff]
  %v627 = vld [vmem:[%s1 + $0x38] sm:$0xff]
  %v628 = vmul.f32 %v620, %v605
  %v629 = vmul.f32 %v621, %v607
  %v630 = vmul.f32 %v622, %v609
  %v631 = vmul.f32 %v623, %v611
  %v632 = vmul.f32 %v624, %v613
  %v633 = vmul.f32 %v625, %v615
  %v634 = vmul.f32 %v626, %v617
  %v635 = vmul.f32 %v627, %v619
  %v636 = vadd.f32 %v628, %v558
  %v637 = vadd.f32 %v629, %v560
  %v638 = vadd.f32 %v630, %v562
  %v639 = vadd.f32 %v631, %v564
  %v640 = vadd.f32 %v632, %v568
  %v641 = vadd.f32 %v633, %v570
  %v642 = vadd.f32 %v634, %v572
  %v643 = vadd.f32 %v635, %v574
  %644 = vst [vmem:[%s6] sm:$0xff] %v636
  %645 = vst [vmem:[%s6 + $0x8] sm:$0xff] %v637
  %646 = vst [vmem:[%s6 + $0x10] sm:$0xff] %v638
  %647 = vst [vmem:[%s6 + $0x18] sm:$0xff] %v639
  %648 = vst [vmem:[%s6 + $0x20] sm:$0xff] %v640
  %649 = vst [vmem:[%s6 + $0x28] sm:$0xff] %v641
  %650 = vst [vmem:[%s6 + $0x30] sm:$0xff] %v642
  %651 = vst [vmem:[%s6 + $0x38] sm:$0xff] %v643
  %652 = vst [vmem:[%s7] sm:$0xff] %v558
  %653 = vst [vmem:[%s7 + $0x8] sm:$0xff] %v560
  %654 = vst [vmem:[%s7 + $0x10] sm:$0xff] %v562
  %655 = vst [vmem:[%s7 + $0x18] sm:$0xff] %v564
  %656 = vst [vmem:[%s7 + $0x20] sm:$0xff] %v568
  %657 = vst [vmem:[%s7 + $0x28] sm:$0xff] %v570
  %658 = vst [vmem:[%s7 + $0x30] sm:$0xff] %v572
  %659 = vst [vmem:[%s7 + $0x38] sm:$0xff] %v574
  %660 = vst [vmem:[%s8] sm:$0xff] %v578
  %661 = vst [vmem:[%s8 + $0x8] sm:$0xff] %v580
  %662 = vst [vmem:[%s8 + $0x10] sm:$0xff] %v582
  %663 = vst [vmem:[%s8 + $0x18] sm:$0xff] %v584
  %664 = vst [vmem:[%s8 + $0x20] sm:$0xff] %v588
  %665 = vst [vmem:[%s8 + $0x28] sm:$0xff] %v590
  %666 = vst [vmem:[%s8 + $0x30] sm:$0xff] %v592
  %667 = vst [vmem:[%s8 + $0x38] sm:$0xff] %v594
  // Predicated region
  $region26: #{vae_head_forward.1} parent=0 // pred_check
    _
  $region27: #{vae_head_forward.1} parent=0 // pred_check_branch
    %669 = sbr.rel (0) target = $region29
  $region28: #{vae_head_forward.1} parent=0 // pred_region
    _
  $region29: #{vae_head_forward.1} parent=0 // pred_fallthru
    _
  // Predicated region
  $region30: #{vae_head_forward.1} parent=0 // pred_check
    _
  $region31: #{vae_head_forward.1} parent=0 // pred_check_branch
    %671 = sbr.rel (0) target = $region33
  $region32: #{vae_head_forward.1} parent=0 // pred_region
    _
  $region33: #{vae_head_forward.1} parent=0 // pred_fallthru
    _
  // Predicated region
  $region34: #{vae_head_forward.1} parent=0 // pred_check
    _
  $region35: #{vae_head_forward.1} parent=0 // pred_check_branch
    %673 = sbr.rel (0) target = $region37
  $region36: #{vae_head_forward.1} parent=0 // pred_region
    _
  $region37: #{vae_head_forward.1} parent=0 // pred_fallthru
    _
  // Predicated region
  $region38: #{vae_head_forward.1} parent=0 // pred_check
    _
  $region39: #{vae_head_forward.1} parent=0 // pred_check_branch
    %675 = sbr.rel (0) target = $region41
  $region40: #{vae_head_forward.1} parent=0 // pred_region
    _
  $region41: #{vae_head_forward.1} parent=0 // pred_fallthru
    _
  // Predicated region
  $region42: #{vae_head_forward.1} parent=0 // pred_check
    _
  $region43: #{vae_head_forward.1} parent=0 // pred_check_branch
    %677 = sbr.rel (0) target = $region45
  $region44: #{vae_head_forward.1} parent=0 // pred_region
    _
  $region45: #{vae_head_forward.1} parent=0 // pred_fallthru
    _
  // Predicated region
  $region46: #{vae_head_forward.1} parent=0 // pred_check
    _
  $region47: #{vae_head_forward.1} parent=0 // pred_check_branch
    %679 = sbr.rel (0) target = $region49
  $region48: #{vae_head_forward.1} parent=0 // pred_region
    _
  $region49: #{vae_head_forward.1} parent=0 // pred_fallthru
    _

</llo_original>
